<compile_context>
chip_gen: v5e
topology: v5e:2x2
jax: 0.10.0
libtpu: 0.0.40
codegen_flags: <defaults>
</compile_context>

<pallas_src>
import jax
import jax.numpy as jnp
from jax.experimental import pallas as pl
from jax.experimental.pallas import tpu as pltpu

_LANE = 128
_SUBLANE = 8
_PAD_UNIT = _LANE * _SUBLANE          # 1024 elements
_MAX_LANE_WIDTH = 8192


def _patch_applier_kernel(img_ref, patch_ref, mask_ref, out_ref):
    # out = img * (1 - mask) + patch.  patch/mask blocks have a leading dim of
    # 1 and broadcast over any folded batch rows of the image block.
    out_ref[...] = img_ref[...] * (1.0 - mask_ref[...]) + patch_ref[...]


def _tpu_params():
    """Generation-aware tiling parameters derived from VMEM capacity."""
    try:
        vmem_cap = int(pltpu.get_tpu_info().vmem_capacity_bytes)
    except Exception:
        vmem_cap = 64 * 1024 * 1024  # conservative (v7x-like) fallback
    if vmem_cap <= 64 * 1024 * 1024:
        # v7x-like: 64 MiB VMEM per TensorCore, 2 TCs per chip.
        return {
            "target_block_bytes": 2 << 20,
            "vmem_cap_limit": 32 << 20,
            "multi_core": True,
        }
    # v5e / v6e: 128 MiB VMEM, single TensorCore.
    return {
        "target_block_bytes": 4 << 20,
        "vmem_cap_limit": 48 << 20,
        "multi_core": False,
    }


def _choose_view(total_p):
    """Pick (S, L) with S * L == total_p, L % 128 == 0, S % 8 == 0.
    total_p is always a multiple of 1024, so L = 128 is a guaranteed fallback."""
    best_l = _LANE
    l = _LANE
    while l <= min(total_p, _MAX_LANE_WIDTH):
        if total_p % l == 0 and (total_p // l) % _SUBLANE == 0:
            best_l = l
        l += _LANE
    return total_p // best_l, best_l


def _choose_s_tile(S, L, itemsize, target_bytes):
    """Largest multiple-of-8 divisor of S whose (s_tile, L) tile stays within
    the per-block byte budget."""
    best = _SUBLANE
    d = _SUBLANE
    while d <= S:
        if S % d == 0 and d * L * itemsize <= target_bytes:
            best = d
        d += _SUBLANE
    return min(best, S)


def _choose_batch_fold(B, n_s_tiles, per_image_block_bytes, target_bytes,
                       keep_multi_steps):
    """Fold batch rows into one block only when the whole image already fits in
    a single spatial tile.  On multi-TensorCore parts keep >=2 (preferably
    even) grid steps along batch so the core split stays balanced."""
    if n_s_tiles != 1 or B <= 1:
        return 1
    cands = [d for d in range(1, B + 1)
             if B % d == 0 and d * per_image_block_bytes <= target_bytes]
    if not cands:
        return 1
    if keep_multi_steps:
        even = [d for d in cands if (B // d) >= 2 and (B // d) % 2 == 0]
        if even:
            return max(even)
        multi = [d for d in cands if (B // d) >= 2]
        if multi:
            return max(multi)
    return max(cands)


def patch_applier(img_batch, patch, patch_mask_tf):
    """img_batch: (B, C, H, W); patch, patch_mask_tf: (1, C, H, W).
    Returns (B, C, H, W) = img_batch * (1 - patch_mask_tf) + patch."""
    B, C, H, W = img_batch.shape
    dtype = img_batch.dtype
    itemsize = jnp.dtype(dtype).itemsize

    # Robustness: bool / mismatched-dtype mask or patch gets cast up front.
    patch = patch.astype(dtype)
    patch_mask_tf = patch_mask_tf.astype(dtype)

    params = _tpu_params()
    target_bytes = params["target_block_bytes"]

    total = C * H * W
    pad = (-total) % _PAD_UNIT
    total_p = total + pad

    # Flatten (contiguous reshape preserves elementwise correspondence) and
    # zero-pad the per-image slab so (S, L) is fully (8,128)-aligned.  The
    # padded tail is sliced off after the call, so its values never leak.
    img2 = img_batch.reshape(B, total)
    patch2 = patch.reshape(1, total)
    mask2 = patch_mask_tf.reshape(1, total)
    if pad:
        img2 = jnp.pad(img2, ((0, 0), (0, pad)))
        patch2 = jnp.pad(patch2, ((0, 0), (0, pad)))
        mask2 = jnp.pad(mask2, ((0, 0), (0, pad)))

    S, L = _choose_view(total_p)
    s_tile = _choose_s_tile(S, L, itemsize, target_bytes)
    n_s_tiles = S // s_tile
    tb = _choose_batch_fold(B, n_s_tiles, s_tile * L * itemsize, target_bytes,
                            keep_multi_steps=params["multi_core"])
    n_b_tiles = B // tb

    img3 = img2.reshape(B, S, L)
    patch3 = patch2.reshape(1, S, L)
    mask3 = mask2.reshape(1, S, L)

    # VMEM budget: double-buffered img/out blocks + double-buffered patch/mask
    # blocks, with 3x headroom, capped by a generation-aware ceiling.
    block_bytes = tb * s_tile * L * itemsize
    bc_bytes = s_tile * L * itemsize
    per_step = 2 * (2 * block_bytes) + 2 * (2 * bc_bytes)
    vmem_limit = int(min(params["vmem_cap_limit"],
                         max(16 * 1024 * 1024, 3 * per_step)))

    n_elems = B * total_p
    cost = pl.CostEstimate(
        flops=3 * n_elems,
        transcendentals=0,
        # img read once, out written once, patch/mask read once per call
        bytes_accessed=(2 * n_elems + 2 * total_p) * itemsize,
    )

    # Grid: spatial tiles OUTER, batch INNER.  With batch innermost the
    # patch/mask block index (0, s, 0) is unchanged between consecutive steps,
    # so they are not re-fetched from HBM during the batch sweep.
    out3 = pl.pallas_call(
        _patch_applier_kernel,
        out_shape=jax.ShapeDtypeStruct((B, S, L), dtype),
        grid_spec=pltpu.PrefetchScalarGridSpec(
            num_scalar_prefetch=0,
            grid=(n_s_tiles, n_b_tiles),
            in_specs=[
                pl.BlockSpec((tb, s_tile, L), lambda s, b: (b, s, 0)),  # image
                pl.BlockSpec((1, s_tile, L), lambda s, b: (0, s, 0)),   # patch
                pl.BlockSpec((1, s_tile, L), lambda s, b: (0, s, 0)),   # mask
            ],
            out_specs=pl.BlockSpec((tb, s_tile, L), lambda s, b: (b, s, 0)),
        ),
        compiler_params=pltpu.CompilerParams(
            dimension_semantics=("parallel", "parallel"),
            vmem_limit_bytes=vmem_limit,
        ),
        cost_estimate=cost,
    )(img3, patch3, mask3)

    out2 = out3.reshape(B, total_p)
    if pad:
        out2 = out2[:, :total]
    return out2.reshape(B, C, H, W)


if __name__ == "__main__":
    key = jax.random.PRNGKey(0)
    k_img, k_patch, k_mask = jax.random.split(key, 3)

    B, C, H, W = 2, 4, 16, 16  # small NCHW shapes

    img_batch = jax.random.uniform(k_img, (B, C, H, W), dtype=jnp.float32)
    patch = jax.random.uniform(k_patch, (1, C, H, W), dtype=jnp.float32)
    # binary mask in {0, 1}, deterministic
    patch_mask_tf = (jax.random.uniform(k_mask, (1, C, H, W)) > 0.5).astype(jnp.float32)

    out = patch_applier(img_batch, patch, patch_mask_tf)
    out = jax.block_until_ready(out)

    # reference check in plain JAX (same math as the PyTorch module)
    ref = img_batch * (1.0 - patch_mask_tf) + patch
    assert out.shape == (B, C, H, W)
    assert jnp.allclose(out, ref, atol=1e-6), "mismatch vs reference"

    # extra check: shape whose C*H*W is NOT a multiple of 8*128 (padding path)
    B2, C2, H2, W2 = 3, 3, 10, 14
    img2 = jax.random.uniform(k_img, (B2, C2, H2, W2), dtype=jnp.float32)
    patch2 = jax.random.uniform(k_patch, (1, C2, H2, W2), dtype=jnp.float32)
    mask2 = (jax.random.uniform(k_mask, (1, C2, H2, W2)) > 0.5).astype(jnp.float32)
    out2 = jax.block_until_ready(patch_applier(img2, patch2, mask2))
    ref2 = img2 * (1.0 - mask2) + patch2
    assert jnp.allclose(out2, ref2, atol=1e-6), "mismatch vs reference (padded path)"

    print("KERNEL_OK")
</pallas_src>

<mosaic_0001>
module attributes {stable_mosaic.version = 11 : i64} {
  func.func @_patch_applier_kernel(%arg0: i32, %arg1: i32, %arg2: memref<1x8x128xf32, #tpu.memory_space<vmem>>, %arg3: memref<1x8x128xf32, #tpu.memory_space<vmem>>, %arg4: memref<1x8x128xf32, #tpu.memory_space<vmem>>, %arg5: memref<1x8x128xf32, #tpu.memory_space<vmem>>) attributes {dimension_semantics = [#tpu.dimension_semantics<parallel>, #tpu.dimension_semantics<parallel>], iteration_bounds = array<i64: 1, 2>, scalar_prefetch = 0 : i64, scratch_operands = 0 : i64, tpu.core_type = #tpu.core_type<tc>, window_params = [{transform_indices = @transform_0, window_bounds = array<i64: 1, 8, 128>}, {transform_indices = @transform_1, window_bounds = array<i64: 1, 8, 128>}, {transform_indices = @transform_2, window_bounds = array<i64: 1, 8, 128>}, {transform_indices = @transform_3, window_bounds = array<i64: 1, 8, 128>}]} {
    %c0 = arith.constant 0 : index
    %c0_0 = arith.constant 0 : index
    %c0_1 = arith.constant 0 : index
    %0 = vector.load %arg2[%c0, %c0_0, %c0_1] : memref<1x8x128xf32, #tpu.memory_space<vmem>>, vector<1x8x128xf32>
    %c0_2 = arith.constant 0 : index
    %c0_3 = arith.constant 0 : index
    %c0_4 = arith.constant 0 : index
    %1 = vector.load %arg4[%c0_2, %c0_3, %c0_4] : memref<1x8x128xf32, #tpu.memory_space<vmem>>, vector<1x8x128xf32>
    %cst = arith.constant 1.000000e+00 : f32
    %2 = vector.broadcast %cst : f32 to vector<1x8x128xf32>
    %3 = arith.subf %2, %1 : vector<1x8x128xf32>
    %4 = arith.mulf %0, %3 : vector<1x8x128xf32>
    %c0_5 = arith.constant 0 : index
    %c0_6 = arith.constant 0 : index
    %c0_7 = arith.constant 0 : index
    %5 = vector.load %arg3[%c0_5, %c0_6, %c0_7] : memref<1x8x128xf32, #tpu.memory_space<vmem>>, vector<1x8x128xf32>
    %6 = arith.addf %4, %5 : vector<1x8x128xf32>
    %c0_8 = arith.constant 0 : index
    %c0_9 = arith.constant 0 : index
    %c0_10 = arith.constant 0 : index
    %7 = vector.load %arg5[%c0_8, %c0_9, %c0_10] : memref<1x8x128xf32, #tpu.memory_space<vmem>>, vector<1x8x128xf32>
    tpu.vector_store %arg5[%c0_8, %c0_9, %c0_10], %6 {strides = array<i32>} : memref<1x8x128xf32, #tpu.memory_space<vmem>>, vector<1x8x128xf32>,
    return
  }
  func.func @transform_0(%arg0: i32, %arg1: i32) -> (i32, i32, i32) {
    %c0_i32 = arith.constant 0 : i32
    %c0_i32_0 = arith.constant 0 : i32
    return %arg1, %arg0, %c0_i32 : i32, i32, i32
  }
  func.func @transform_1(%arg0: i32, %arg1: i32) -> (i32, i32, i32) {
    %c0_i32 = arith.constant 0 : i32
    %c0_i32_0 = arith.constant 0 : i32
    %c0_i32_1 = arith.constant 0 : i32
    return %c0_i32, %arg0, %c0_i32_0 : i32, i32, i32
  }
  func.func @transform_2(%arg0: i32, %arg1: i32) -> (i32, i32, i32) {
    %c0_i32 = arith.constant 0 : i32
    %c0_i32_0 = arith.constant 0 : i32
    %c0_i32_1 = arith.constant 0 : i32
    return %c0_i32, %arg0, %c0_i32_0 : i32, i32, i32
  }
  func.func @transform_3(%arg0: i32, %arg1: i32) -> (i32, i32, i32) {
    %c0_i32 = arith.constant 0 : i32
    %c0_i32_0 = arith.constant 0 : i32
    return %arg1, %arg0, %c0_i32 : i32, i32, i32
  }
}

</mosaic_0001>

<llo_original>
// kernel: tpu_custom_call.1
$region0: #{tpu_custom_call.1}
  #allocation0 [shape = 'u32[]', space=smem, size = 0x4, offset = 0x4, fixed_abs, tag = 'smem constant byte address 0x4 - core index']
  #allocation1 [shape = 'u32[72,128]{1,0:T(1,128)}', space=vmem, size = 0x9000, scoped, tag = 'internal scratch']
  %s0 = inlined_call_operand.hbm [shape: f32[2,8,128], index: 0, kind: input, shape index: {}]
  %s1 = inlined_call_operand.hbm [shape: f32[1,8,128], index: 1, kind: input, shape index: {}]
  %s2 = inlined_call_operand.hbm [shape: f32[1,8,128], index: 2, kind: input, shape index: {}]
  %s3 = inlined_call_operand.hbm [shape: f32[2,8,128], index: 3, kind: output, shape index: {}]
  %s4 = sld [smem:[#allocation0]]
  $region57: #{tpu_custom_call.1} parent=0
    _
  %s6 = ssub.s32 1, %s4
  %s7 = scalar_select 0, %s6, %s4
  $region1: #{tpu_custom_call.1} parent=0
    #allocation2 [shape = 'u8[8192]{0}', space=vmem, size = 0x2000, scoped, tag = 'input window, operand 0']
    #allocation3 [shape = 's32[2]{0}', space=sflag, size = 0x8, scoped, tag = 'scoped memory for tpu_custom_call.1']
    #allocation4 [shape = 's32[2]{0}', space=sflag, size = 0x8, scoped, tag = 'scoped memory for tpu_custom_call.1']
    #allocation5 [shape = 'u8[4096]{0}', space=vmem, size = 0x1000, scoped, tag = 'input window, operand 1, single buffered']
    #allocation6 [shape = 's32[1]{0}', space=sflag, size = 0x4, scoped, tag = 'scoped memory for tpu_custom_call.1']
    #allocation7 [shape = 'u8[4096]{0}', space=vmem, size = 0x1000, scoped, tag = 'input window, operand 2, single buffered']
    #allocation8 [shape = 'u8[8192]{0}', space=vmem, size = 0x2000, scoped, tag = 'output window, operand 0']
    %8 = vsyncpa [#allocation3], 0
    %s9 = scalar_lea.sflag [#allocation3], 1
    %10 = vsyncpa %s9, 0
    %11 = vsyncpa [#allocation6], 0
    %12 = vsyncpa [#allocation4], 0
    %s13 = scalar_lea.sflag [#allocation4], 1
    %14 = vsyncpa %s13, 0
    loop: start=0, step=1, limit=4
    $region2: #{tpu_custom_call.1} parent=1 // loop_pre_header
      _
    $region3: #{tpu_custom_call.1} parent=1 // loop_header
      %s16 = sphi 0, %s20
      %p17 = scmp.ge.s32.totalorder %s16, 4
      %s23 = sphi 0, %s35
      %s24 = sphi 0, %s31
      %s25 = sphi 0, %s23
      %s26 = sphi 0, %s24
      %s27 = sphi 0, %s25
      %s28 = sphi 0, %s26
      %s40 = sphi 0, %s42
      %s43 = sphi 0, %s40
      %s44 = sphi 0, %s43
      %s60 = sphi 0, %s44
      %s66 = sphi 0, %s68
      %s69 = sphi 0, %s66
      %s70 = sphi 0, %s69
      %s86 = sphi 0, %s70
      %s92 = sphi 0, %s94
      %s95 = sphi 0, %s92
      %s96 = sphi 0, %s95
      %s112 = sphi 0, %s96
      %s120 = sphi 0, %s122
      %s123 = sphi 0, %s120
      %s124 = sphi 0, %s123
      %s140 = sphi 0, %s124
    $region4: #{tpu_custom_call.1} parent=1 // loop_header_branch
      %19 = sbr.rel (%p17) target = $region8
    $region5: #{tpu_custom_call.1} parent=1 // loop_body
      %s21 = ssub.s32 %s16, 1
      %s22 = ssub.s32 %s16, 2
      %s29 = sadd.s32 1, %s24
      %p30 = scmp.ge.s32.totalorder %s29, 2
      %s31 = scalar_select %p30, 0, %s29
      %s32 = sadd.s32 1, %s23
      %s33 = scalar_select %p30, %s32, %s23
      %p34 = scmp.ge.s32.totalorder %s33, 1
      %s35 = scalar_select %p34, 0, %s33
      %s36 = ssub.s32 %s24, %s31
      %s37 = ssub.s32 %s23, %s35
      %s38 = sor.u32 %s36, %s37
      %p39 = scmp.eq.s32.totalorder %s38, 0
      %s41 = sadd.s32 %s40, 1
      %s42 = scalar_select %p39, %s40, %s41
      %p45 = pneg %p39
      %p46 = scmp.eq.s32.totalorder %s16, 1
      %p47 = por %p45, %p46
      %p48 = scmp.ne.s32.totalorder %s40, %s43
      %p49 = scmp.eq.s32.totalorder %s16, 0
      %p50 = por %p48, %p49
      %p51 = scmp.ne.s32.totalorder %s40, %s43
      %p52 = scmp.eq.s32.totalorder %s21, 1
      %p53 = por %p51, %p52
      %p54 = scmp.ne.s32.totalorder %s43, %s44
      %p55 = scmp.eq.s32.totalorder %s21, 0
      %p56 = por %p54, %p55
      %p57 = scmp.ne.s32.totalorder %s43, %s44
      %p58 = scmp.eq.s32.totalorder %s22, 1
      %p59 = por %p57, %p58
      %p61 = scmp.ne.s32.totalorder %s44, %s60
      %p62 = scmp.eq.s32.totalorder %s22, 0
      %p63 = por %p61, %p62
      %s64 = ssub.s32 %s23, %s35
      %p65 = scmp.eq.s32.totalorder %s64, 0
      %s67 = sadd.s32 %s66, 1
      %s68 = scalar_select %p65, %s66, %s67
      %p71 = pneg %p65
      %p72 = scmp.eq.s32.totalorder %s16, 1
      %p73 = por %p71, %p72
      %p74 = scmp.ne.s32.totalorder %s66, %s69
      %p75 = scmp.eq.s32.totalorder %s16, 0
      %p76 = por %p74, %p75
      %p77 = scmp.ne.s32.totalorder %s66, %s69
      %p78 = scmp.eq.s32.totalorder %s21, 1
      %p79 = por %p77, %p78
      %p80 = scmp.ne.s32.totalorder %s69, %s70
      %p81 = scmp.eq.s32.totalorder %s21, 0
      %p82 = por %p80, %p81
      %p83 = scmp.ne.s32.totalorder %s69, %s70
      %p84 = scmp.eq.s32.totalorder %s22, 1
      %p85 = por %p83, %p84
      %p87 = scmp.ne.s32.totalorder %s70, %s86
      %p88 = scmp.eq.s32.totalorder %s22, 0
      %p89 = por %p87, %p88
      %s90 = ssub.s32 %s23, %s35
      %p91 = scmp.eq.s32.totalorder %s90, 0
      %s93 = sadd.s32 %s92, 1
      %s94 = scalar_select %p91, %s92, %s93
      %p97 = pneg %p91
      %p98 = scmp.eq.s32.totalorder %s16, 1
      %p99 = por %p97, %p98
      %p100 = scmp.ne.s32.totalorder %s92, %s95
      %p101 = scmp.eq.s32.totalorder %s16, 0
      %p102 = por %p100, %p101
      %p103 = scmp.ne.s32.totalorder %s92, %s95
      %p104 = scmp.eq.s32.totalorder %s21, 1
      %p105 = por %p103, %p104
      %p106 = scmp.ne.s32.totalorder %s95, %s96
      %p107 = scmp.eq.s32.totalorder %s21, 0
      %p108 = por %p106, %p107
      %p109 = scmp.ne.s32.totalorder %s95, %s96
      %p110 = scmp.eq.s32.totalorder %s22, 1
      %p111 = por %p109, %p110
      %p113 = scmp.ne.s32.totalorder %s96, %s112
      %p114 = scmp.eq.s32.totalorder %s22, 0
      %p115 = por %p113, %p114
      %s116 = ssub.s32 %s24, %s31
      %s117 = ssub.s32 %s23, %s35
      %s118 = sor.u32 %s116, %s117
      %p119 = scmp.eq.s32.totalorder %s118, 0
      %s121 = sadd.s32 %s120, 1
      %s122 = scalar_select %p119, %s120, %s121
      %p125 = pneg %p119
      %p126 = scmp.eq.s32.totalorder %s16, 1
      %p127 = por %p125, %p126
      %p128 = scmp.ne.s32.totalorder %s120, %s123
      %p129 = scmp.eq.s32.totalorder %s16, 0
      %p130 = por %p128, %p129
      %p131 = scmp.ne.s32.totalorder %s120, %s123
      %p132 = scmp.eq.s32.totalorder %s21, 1
      %p133 = por %p131, %p132
      %p134 = scmp.ne.s32.totalorder %s123, %s124
      %p135 = scmp.eq.s32.totalorder %s21, 0
      %p136 = por %p134, %p135
      %p137 = scmp.ne.s32.totalorder %s123, %s124
      %p138 = scmp.eq.s32.totalorder %s22, 1
      %p139 = por %p137, %p138
      %p141 = scmp.ne.s32.totalorder %s124, %s140
      %p142 = scmp.eq.s32.totalorder %s22, 0
      %p143 = por %p141, %p142
      %p144 = scmp.le.s32.totalorder 1, %s16
      %p145 = scmp.lt.s32.totalorder %s16, 3
      %p146 = pnand %p144, %p145
      %p147 = pneg %p146
      // Predicated region
      $region9: #{tpu_custom_call.1} parent=5 // pred_check
        _
      $region10: #{tpu_custom_call.1} parent=5 // pred_check_branch
        %149 = sbr.rel (%p146) target = $region12
      $region11: #{tpu_custom_call.1} parent=5 // pred_region
        %s150 = ssub.s32 %s16, 1
        // Predicated region
        $region13: #{tpu_custom_call.1} parent=11 // pred_check
          %p151 = pneg %p82
        $region14: #{tpu_custom_call.1} parent=11 // pred_check_branch
          %153 = sbr.rel (%p151) target = $region16
        $region15: #{tpu_custom_call.1} parent=11 // pred_region
          %155 = vsyncadd [#allocation6], 0
          %s156 = smul.addr %s25, 8
          %s157 = scalar_lea.hbm %s1, %s156
          %s159 = sshll.u32 %s157, 4
          %s160 = int_to_ptr.hbm [resolvable:$true] %s159
          %s161 = sshll.u32 [#allocation5], 4
          %s162 = int_to_ptr.vmem [resolvable:$true] %s161
          %164 = dma.hbm_to_vmem [thread:$0]  %s160, 128, %s162, [#allocation6]
        $region16: #{tpu_custom_call.1} parent=11 // pred_fallthru
          _
        // Predicated region
        $region17: #{tpu_custom_call.1} parent=11 // pred_check
          %p165 = pneg %p108
        $region18: #{tpu_custom_call.1} parent=11 // pred_check_branch
          %167 = sbr.rel (%p165) target = $region20
        $region19: #{tpu_custom_call.1} parent=11 // pred_region
          %169 = vsyncadd [#allocation6], 0
          %s170 = smul.addr %s25, 8
          %s171 = scalar_lea.hbm %s2, %s170
          %s173 = sshll.u32 %s171, 4
          %s174 = int_to_ptr.hbm [resolvable:$true] %s173
          %s175 = sshll.u32 [#allocation7], 4
          %s176 = int_to_ptr.vmem [resolvable:$true] %s175
          %178 = dma.hbm_to_vmem [thread:$0]  %s174, 128, %s176, [#allocation6]
        $region20: #{tpu_custom_call.1} parent=11 // pred_fallthru
          _
      $region12: #{tpu_custom_call.1} parent=5 // pred_fallthru
        _
      %p179 = scmp.lt.s32.totalorder %s16, 2
      // Predicated region
      $region21: #{tpu_custom_call.1} parent=5 // pred_check
        %p180 = pneg %p179
      $region22: #{tpu_custom_call.1} parent=5 // pred_check_branch
        %182 = sbr.rel (%p180) target = $region24
      $region23: #{tpu_custom_call.1} parent=5 // pred_region
        // Predicated region
        $region25: #{tpu_custom_call.1} parent=23 // pred_check
          %p183 = pneg %p50
        $region26: #{tpu_custom_call.1} parent=23 // pred_check_branch
          %185 = sbr.rel (%p183) target = $region28
        $region27: #{tpu_custom_call.1} parent=23 // pred_region
          %s186 = sand.u32 %s40, 1
          %s187 = scalar_lea.sflag [#allocation3], %s186
          %s188 = sand.u32 %s40, 1
          %s189 = smul.addr %s188, 8
          %s190 = scalar_lea.vmem [#allocation2], %s189
          %192 = vsyncadd %s187, 0
          %s193 = sadd.s32 %s23, %s24
          %s194 = smul.addr %s193, 8
          %s195 = scalar_lea.hbm %s0, %s194
          %s197 = sshll.u32 %s195, 4
          %s198 = int_to_ptr.hbm [resolvable:$true] %s197
          %s199 = sshll.u32 %s190, 4
          %s200 = int_to_ptr.vmem [resolvable:$true] %s199
          %202 = dma.hbm_to_vmem [thread:$0]  %s198, 128, %s200, %s187
        $region28: #{tpu_custom_call.1} parent=23 // pred_fallthru
          _
      $region24: #{tpu_custom_call.1} parent=5 // pred_fallthru
        _
      %p203 = scmp.le.s32.totalorder 1, %s16
      %p204 = scmp.lt.s32.totalorder %s16, 3
      %p205 = pnand %p203, %p204
      %p206 = pneg %p205
      // Predicated region
      $region29: #{tpu_custom_call.1} parent=5 // pred_check
        _
      $region30: #{tpu_custom_call.1} parent=5 // pred_check_branch
        %208 = sbr.rel (%p205) target = $region32
      $region31: #{tpu_custom_call.1} parent=5 // pred_region
        %s209 = ssub.s32 %s16, 1
        %s210 = sand.u32 %s43, 1
        %s211 = scalar_lea.sflag [#allocation3], %s210
        %s212 = sand.u32 %s43, 1
        %s213 = smul.addr %s212, 8
        %s214 = scalar_lea.vmem [#allocation2], %s213
        // Predicated region
        $region33: #{tpu_custom_call.1} parent=31 // pred_check
          %p215 = pneg %p56
        $region34: #{tpu_custom_call.1} parent=31 // pred_check_branch
          %217 = sbr.rel (%p215) target = $region36
        $region35: #{tpu_custom_call.1} parent=31 // pred_region
          %219 = dma.done %s211, 128
        $region36: #{tpu_custom_call.1} parent=31 // pred_fallthru
          _
        // Predicated region
        $region37: #{tpu_custom_call.1} parent=31 // pred_check
          %p220 = pneg %p82
        $region38: #{tpu_custom_call.1} parent=31 // pred_check_branch
          %222 = sbr.rel (%p220) target = $region40
        $region39: #{tpu_custom_call.1} parent=31 // pred_region
          %224 = dma.done [#allocation6], 128
        $region40: #{tpu_custom_call.1} parent=31 // pred_fallthru
          _
        // Predicated region
        $region41: #{tpu_custom_call.1} parent=31 // pred_check
          %p225 = pneg %p108
        $region42: #{tpu_custom_call.1} parent=31 // pred_check_branch
          %227 = sbr.rel (%p225) target = $region44
        $region43: #{tpu_custom_call.1} parent=31 // pred_region
          %229 = dma.done [#allocation6], 128
        $region44: #{tpu_custom_call.1} parent=31 // pred_fallthru
          _
        %s230 = sand.u32 %s43, 1
        %s231 = scalar_lea.sflag [#allocation3], %s230
        %s232 = sand.u32 %s43, 1
        %s233 = smul.addr %s232, 8
        %s234 = scalar_lea.vmem [#allocation2], %s233
        %p235 = pneg %p56
        %p236 = pneg %p53
        %p237 = pneg %p82
        %p238 = pneg %p79
        %p239 = pneg %p108
        %p240 = pneg %p105
        %p241 = pneg %p136
        %p242 = pneg %p133
        %s243 = sand.u32 %s123, 1
        %s244 = scalar_lea.sflag [#allocation4], %s243
        %s245 = sand.u32 %s123, 1
        %s246 = smul.addr %s245, 8
        %s247 = scalar_lea.vmem [#allocation8], %s246
        %v248 = vld [vmem:[%s214] sm:$0xff]
        %v249 = vld [vmem:[#allocation7] sm:$0xff]
        %v250 = vsub.f32 1.0, %v249
        %v251 = vmul.f32 %v248, %v250
        %v252 = vld [vmem:[#allocation5] sm:$0xff]
        %v253 = vadd.f32 %v251, %v252
        %254 = vst [vmem:[%s247] sm:$0xff] %v253
        %s255 = sand.u32 %s123, 1
        %s256 = scalar_lea.sflag [#allocation4], %s255
        %s257 = sand.u32 %s123, 1
        %s258 = smul.addr %s257, 8
        %s259 = scalar_lea.vmem [#allocation8], %s258
        // Predicated region
        $region45: #{tpu_custom_call.1} parent=31 // pred_check
          %p260 = pneg %p133
        $region46: #{tpu_custom_call.1} parent=31 // pred_check_branch
          %262 = sbr.rel (%p260) target = $region48
        $region47: #{tpu_custom_call.1} parent=31 // pred_region
          %264 = vsyncadd %s256, 0
          %s265 = sadd.s32 %s25, %s26
          %s266 = smul.addr %s265, 8
          %s267 = scalar_lea.hbm %s3, %s266
          %s269 = sshll.u32 %s259, 4
          %s270 = int_to_ptr.vmem [resolvable:$true] %s269
          %s271 = sshll.u32 %s267, 4
          %s272 = int_to_ptr.hbm [resolvable:$true] %s271
          %274 = dma.vmem_to_hbm [thread:$0]  %s270, 128, %s272, %s256
        $region48: #{tpu_custom_call.1} parent=31 // pred_fallthru
          _
      $region32: #{tpu_custom_call.1} parent=5 // pred_fallthru
        _
      %p275 = scmp.le.s32.totalorder 2, %s16
      // Predicated region
      $region49: #{tpu_custom_call.1} parent=5 // pred_check
        %p276 = pneg %p275
      $region50: #{tpu_custom_call.1} parent=5 // pred_check_branch
        %278 = sbr.rel (%p276) target = $region52
      $region51: #{tpu_custom_call.1} parent=5 // pred_region
        %s279 = ssub.s32 %s16, 2
        // Predicated region
        $region53: #{tpu_custom_call.1} parent=51 // pred_check
          %p280 = pneg %p139
        $region54: #{tpu_custom_call.1} parent=51 // pred_check_branch
          %282 = sbr.rel (%p280) target = $region56
        $region55: #{tpu_custom_call.1} parent=51 // pred_region
          %s283 = sand.u32 %s124, 1
          %s284 = scalar_lea.sflag [#allocation4], %s283
          %s285 = sand.u32 %s124, 1
          %s286 = smul.addr %s285, 8
          %s287 = scalar_lea.vmem [#allocation8], %s286
          %289 = dma.done %s284, 128
        $region56: #{tpu_custom_call.1} parent=51 // pred_fallthru
          _
      $region52: #{tpu_custom_call.1} parent=5 // pred_fallthru
        _
    $region6: #{tpu_custom_call.1} parent=1 // loop_footer
      %s20 = sadd.s32 1, %s16
    $region7: #{tpu_custom_call.1} parent=1 // loop_footer_branch
      %15 = sbr.rel target = $region3
    $region8: #{tpu_custom_call.1} parent=1 // loop_exit
      _
    %290 = vsyncpa [#allocation3], 1
    %s291 = scalar_lea.sflag [#allocation3], 1
    %292 = vsyncpa %s291, 1
    %293 = vsyncpa [#allocation6], 1
    %294 = vsyncpa [#allocation4], 1
    %s295 = scalar_lea.sflag [#allocation4], 1
    %296 = vsyncpa %s295, 1

</llo_original>
